<compile_context>
chip_gen: v7x
topology: tpu7x:2x2x1
jax: 0.10.0
libtpu: 0.0.40
codegen_flags: <defaults>
</compile_context>

<pallas_src>
import functools

import jax
import jax.numpy as jnp
from jax import lax
from jax.experimental import pallas as pl
from jax.experimental.pallas import tpu as pltpu


def _bilinear_softmax_attn_kernel(length_ref, ctx_ref, ctx_t_ref, q_ref,
                                  att_ref, scores_ref, *, tq):
    b = pl.program_id(0)
    qi = pl.program_id(1)
    l = length_ref[b]                                   # scalar length for this batch (SMEM)

    q = q_ref[0]                                        # (TQ, D)
    c = ctx_ref[0]                                      # (S_c_pad, D)
    ct = ctx_t_ref[0]                                   # (D, S_c_pad)  pre-transposed in HBM

    # raw = q @ c^T via a plain (M,K)x(K,N) MXU matmul on the pre-transposed context
    # (no in-kernel transpose / XLU traffic), f32 accumulation.
    raw = jnp.dot(q, ct, preferred_element_type=jnp.float32)   # (TQ, S_c_pad)

    # Context mask (torch: raw_scores[b, :, l:] = -inf). Also neutralizes the zero
    # padding S_ctx -> S_c_pad. Large finite negative so length == 0 never yields NaN.
    ctx_ids = lax.broadcasted_iota(jnp.int32, raw.shape, 1)
    raw = jnp.where(ctx_ids < l, raw, jnp.float32(-1e30))

    # Softmax over the context axis (f32 math on all generations).
    m = jnp.max(raw, axis=-1, keepdims=True)
    e = jnp.exp(raw - m)
    denom = jnp.sum(e, axis=-1, keepdims=True)
    inv = pl.reciprocal(denom)                          # exact; (TQ,1) tile, off the crit path

    # Query-row mask (torch: scores[b, l:] = 0) folded into the per-row scale instead of
    # a second full-tile where (also handles the length==0 "NaN then zeroed" path).
    row_ids = lax.broadcasted_iota(jnp.int32, (raw.shape[0], 1), 0) + qi * tq
    inv = jnp.where(row_ids < l, inv, jnp.float32(0.0))

    s = e * inv                                         # (TQ, S_c_pad), f32

    # attended_context = scores @ context (probabilities cast to the context dtype for
    # the MXU; accumulation stays f32).
    att = jnp.dot(s.astype(c.dtype), c, preferred_element_type=jnp.float32)

    att_ref[0] = att.astype(att_ref.dtype)
    scores_ref[0] = s.astype(scores_ref.dtype)


def _vmem_limit_bytes():
    """Generation-aware scoped-VMEM limit: ~75% of physical VMEM per TensorCore
    (128 MiB on v5e/v6e -> 96 MiB, 64 MiB on v7x -> 48 MiB)."""
    try:
        cap = pltpu.get_tpu_info().vmem_capacity_bytes
    except Exception:
        cap = 64 * 1024 * 1024                          # conservative fallback (v7x-safe)
    return int(cap) * 3 // 4


def _choose_tq(s_q_pad, s_c_pad, d, in_itemsize, att_itemsize, scores_itemsize,
               budget_bytes):
    """Largest query-row tile (multiple of 8, divides s_q_pad) whose VMEM footprint fits
    the budget. Counts: context + context^T blocks (double-buffered by the pipeline even
    though they only change with the batch index), double-buffered query/att/scores
    tiles, and the f32 (TQ, S_c_pad) in-kernel intermediates (raw, e, s)."""
    ctx_bytes = 2 * 2 * s_c_pad * d * in_itemsize       # ctx + ctx^T, 2 buffers each
    avail = budget_bytes - ctx_bytes
    for tq in sorted({s_q_pad, 4096, 2048, 1024, 512, 256, 128, 64, 32, 16, 8},
                     reverse=True):
        if tq > s_q_pad or tq % 8 or s_q_pad % tq:
            continue
        per_tq = (2 * tq * d * in_itemsize              # query tile (double-buffered)
                  + 2 * tq * d * att_itemsize           # attended-output tile
                  + 2 * tq * s_c_pad * scores_itemsize  # scores-output tile
                  + 3 * tq * s_c_pad * 4)               # f32 raw / e / s intermediates
        if per_tq <= avail:
            return tq
    # TODO(synk): at extreme (S_ctx, D) on v7x even tq=8 may not fit the 64 MiB VMEM;
    # that regime needs a flash-style online-softmax tiling over S_ctx.
    return 8


def bilinear_softmax_attention(context, query, length, *,
                               scores_dtype=None, matmul_dtype=None):
    """Forward pass of nnsum's BiLinearSoftmaxAttention.

    scores_dtype: dtype of the returned scores (default: input result dtype, matching
        the PyTorch module). Pass jnp.bfloat16 to halve the dominant HBM writeback.
    matmul_dtype: optional dtype (e.g. jnp.bfloat16) for the matmul operands; f32
        accumulation is kept. Softmax math is always f32.
    """
    B, S_c, D = context.shape
    _, S_q, _ = query.shape
    length = length.astype(jnp.int32)

    if scores_dtype is None:
        scores_dtype = jnp.result_type(query.dtype, context.dtype)

    # Pad query rows to a multiple of 8 (legal sublane tile) and context keys to a
    # multiple of 128 (lane-dense scores stores; padded keys masked in-kernel).
    s_q_pad = ((S_q + 7) // 8) * 8
    s_c_pad = ((S_c + 127) // 128) * 128

    query_k = query
    context_k = context
    if matmul_dtype is not None:
        query_k = query_k.astype(matmul_dtype)
        context_k = context_k.astype(matmul_dtype)
    if s_q_pad != S_q:
        query_k = jnp.pad(query_k, ((0, 0), (0, s_q_pad - S_q), (0, 0)))
    if s_c_pad != S_c:
        context_k = jnp.pad(context_k, ((0, 0), (0, s_c_pad - S_c), (0, 0)))
    # Transpose once in HBM via XLA; read cost is negligible next to the scores write.
    context_t = jnp.transpose(context_k, (0, 2, 1))     # (B, D, S_c_pad)

    in_itemsize = jnp.dtype(context_k.dtype).itemsize
    att_itemsize = jnp.dtype(query.dtype).itemsize
    scores_itemsize = jnp.dtype(scores_dtype).itemsize

    vmem_limit = _vmem_limit_bytes()
    tq = _choose_tq(s_q_pad, s_c_pad, D, in_itemsize, att_itemsize, scores_itemsize,
                    budget_bytes=(vmem_limit * 9) // 10)    # headroom for compiler scratch
    grid = (B, s_q_pad // tq)

    kernel = functools.partial(_bilinear_softmax_attn_kernel, tq=tq)

    grid_spec = pltpu.PrefetchScalarGridSpec(
        num_scalar_prefetch=1,                          # `length` lands in SMEM
        grid=grid,
        in_specs=[
            pl.BlockSpec((1, s_c_pad, D), lambda b, qi, lref: (b, 0, 0)),   # context
            pl.BlockSpec((1, D, s_c_pad), lambda b, qi, lref: (b, 0, 0)),   # context^T
            pl.BlockSpec((1, tq, D), lambda b, qi, lref: (b, qi, 0)),       # query tile
        ],
        out_specs=[
            pl.BlockSpec((1, tq, D), lambda b, qi, lref: (b, qi, 0)),       # attended tile
            pl.BlockSpec((1, tq, s_c_pad), lambda b, qi, lref: (b, qi, 0)), # scores tile
        ],
    )

    out_shapes = (
        jax.ShapeDtypeStruct((B, s_q_pad, D), query.dtype),
        jax.ShapeDtypeStruct((B, s_q_pad, s_c_pad), scores_dtype),
    )

    att, scores = pl.pallas_call(
        kernel,
        out_shape=out_shapes,
        grid_spec=grid_spec,
        compiler_params=pltpu.CompilerParams(
            dimension_semantics=("parallel", "parallel"),
            vmem_limit_bytes=vmem_limit,
        ),
    )(length, context_k, context_t, query_k)

    att = att[:, :S_q]
    scores = scores[:, :S_q, :S_c]

    # output = cat([query, attended_context], dim=2); the pass-through half is done here
    # (kernel never touches it) so kernel stores stay lane-dense and output traffic halves.
    output = jnp.concatenate([query, att], axis=2)
    return output, scores


def _reference(context, query, length):
    # Pure-JAX reference mirroring the PyTorch semantics.
    raw = jnp.einsum("bqd,bkd->bqk", query, context)
    S_q, S_c = raw.shape[1], raw.shape[2]
    ctx_ids = jnp.arange(S_c)[None, None, :]
    raw = jnp.where(ctx_ids < length[:, None, None], raw, -jnp.inf)
    scores = jax.nn.softmax(raw, axis=2)
    q_ids = jnp.arange(S_q)[None, :, None]
    scores = jnp.where(q_ids < length[:, None, None], scores, 0.0)
    att = jnp.einsum("bqk,bkd->bqd", scores, context)
    out = jnp.concatenate([query, att], axis=2)
    return out, scores


if __name__ == "__main__":
    key = jax.random.PRNGKey(0)
    k1, k2 = jax.random.split(key)

    B, S, D = 2, 8, 32
    context = jax.random.normal(k1, (B, S, D), dtype=jnp.float32)
    query = jax.random.normal(k2, (B, S, D), dtype=jnp.float32)
    length = jnp.array([5, 8], dtype=jnp.int32)

    ref_out, ref_scores = _reference(context, query, length)

    # Default path (matches the PyTorch module's dtypes).
    out, scores = bilinear_softmax_attention(context, query, length)
    jax.block_until_ready(out)
    jax.block_until_ready(scores)
    assert out.shape == (B, S, 2 * D) and scores.shape == (B, S, S)
    assert jnp.allclose(out, ref_out, atol=2e-3, rtol=2e-3), "output mismatch"
    assert jnp.allclose(scores, ref_scores, atol=2e-3, rtol=2e-3), "scores mismatch"

    # bf16-scores path: only the final store dtype changes (halves the dominant HBM
    # writeback); the softmax / matmul math is unchanged.
    out_b, scores_b = bilinear_softmax_attention(context, query, length,
                                                 scores_dtype=jnp.bfloat16)
    jax.block_until_ready(out_b)
    jax.block_until_ready(scores_b)
    assert scores_b.dtype == jnp.bfloat16
    assert jnp.allclose(out_b, ref_out, atol=2e-3, rtol=2e-3), "bf16-scores output mismatch"
    assert jnp.allclose(scores_b.astype(jnp.float32), ref_scores,
                        atol=1e-2, rtol=1e-2), "bf16 scores mismatch"

    print("KERNEL_OK")
</pallas_src>

<mosaic_0001>
module attributes {stable_mosaic.version = 11 : i64} {
  func.func @_bilinear_softmax_attn_kernel(%arg0: i32, %arg1: i32, %arg2: memref<2xi32, #tpu.memory_space<smem>>, %arg3: memref<1x128x32xf32, #tpu.memory_space<vmem>>, %arg4: memref<1x32x128xf32, #tpu.memory_space<vmem>>, %arg5: memref<1x8x32xf32, #tpu.memory_space<vmem>>, %arg6: memref<1x8x32xf32, #tpu.memory_space<vmem>>, %arg7: memref<1x8x128xf32, #tpu.memory_space<vmem>>) attributes {dimension_semantics = [#tpu.dimension_semantics<parallel>, #tpu.dimension_semantics<parallel>], iteration_bounds = array<i64: 2, 1>, scalar_prefetch = 1 : i64, scratch_operands = 0 : i64, tpu.core_type = #tpu.core_type<tc>, window_params = [{transform_indices = @transform_0, window_bounds = array<i64: 1, 128, 32>}, {transform_indices = @transform_1, window_bounds = array<i64: 1, 32, 128>}, {transform_indices = @transform_2, window_bounds = array<i64: 1, 8, 32>}, {transform_indices = @transform_3, window_bounds = array<i64: 1, 8, 32>}, {transform_indices = @transform_4, window_bounds = array<i64: 1, 8, 128>}]} {
    %0 = arith.index_cast %arg0 : i32 to index
    %1 = memref.load %arg2[%0] : memref<2xi32, #tpu.memory_space<smem>>
    %c0 = arith.constant 0 : index
    %c0_0 = arith.constant 0 : index
    %c0_1 = arith.constant 0 : index
    %2 = vector.load %arg5[%c0, %c0_0, %c0_1] : memref<1x8x32xf32, #tpu.memory_space<vmem>>, vector<1x8x32xf32>
    %3 = vector.shape_cast %2 : vector<1x8x32xf32> to vector<8x32xf32>
    %c0_2 = arith.constant 0 : index
    %c0_3 = arith.constant 0 : index
    %c0_4 = arith.constant 0 : index
    %4 = vector.load %arg3[%c0_2, %c0_3, %c0_4] : memref<1x128x32xf32, #tpu.memory_space<vmem>>, vector<1x128x32xf32>
    %5 = vector.shape_cast %4 : vector<1x128x32xf32> to vector<128x32xf32>
    %c0_5 = arith.constant 0 : index
    %c0_6 = arith.constant 0 : index
    %c0_7 = arith.constant 0 : index
    %6 = vector.load %arg4[%c0_5, %c0_6, %c0_7] : memref<1x32x128xf32, #tpu.memory_space<vmem>>, vector<1x32x128xf32>
    %7 = vector.shape_cast %6 : vector<1x32x128xf32> to vector<32x128xf32>
    %cst = arith.constant dense<0.000000e+00> : vector<8x128xf32>
    %8 = tpu.matmul %3, %7, %cst {dimension_numbers = #tpu.dot_dimension_numbers<[1], [0], [0], [1], [0, 0, 1, 1], [], []>} : vector<8x32xf32>, vector<32x128xf32>, vector<8x128xf32> -> vector<8x128xf32>
    %9 = tpu.iota {dimensions = array<i32: 1>} : vector<8x128xi32>
    %10 = vector.broadcast %1 : i32 to vector<8x128xi32>
    %11 = arith.cmpi slt, %9, %10 : vector<8x128xi32>
    %cst_8 = arith.constant -1.000000e+30 : f32
    %12 = vector.broadcast %cst_8 : f32 to vector<8x128xf32>
    %13 = arith.select %11, %8, %12 : vector<8x128xi1>, vector<8x128xf32>
    %cst_9 = arith.constant dense<0xFF800000> : vector<8xf32>
    %14 = vector.multi_reduction <maximumf>, %13, %cst_9 [1] : vector<8x128xf32> to vector<8xf32>
    %15 = vector.shape_cast %14 : vector<8xf32> to vector<8x1xf32>
    %16 = vector.broadcast %15 : vector<8x1xf32> to vector<8x128xf32>
    %17 = arith.subf %13, %16 : vector<8x128xf32>
    %18 = math.exp %17 : vector<8x128xf32>
    %cst_10 = arith.constant dense<0.000000e+00> : vector<8xf32>
    %19 = vector.multi_reduction <add>, %18, %cst_10 [1] : vector<8x128xf32> to vector<8xf32>
    %20 = vector.shape_cast %19 : vector<8xf32> to vector<8x1xf32>
    %21 = tpu.reciprocal %20 : vector<8x1xf32> -> vector<8x1xf32>
    %22 = tpu.iota {dimensions = array<i32: 0>} : vector<8x1xi32>
    %c8_i32 = arith.constant 8 : i32
    %23 = arith.muli %arg1, %c8_i32 : i32
    %24 = vector.broadcast %23 : i32 to vector<8x1xi32>
    %25 = arith.addi %22, %24 : vector<8x1xi32>
    %26 = vector.broadcast %1 : i32 to vector<8x1xi32>
    %27 = arith.cmpi slt, %25, %26 : vector<8x1xi32>
    %cst_11 = arith.constant 0.000000e+00 : f32
    %28 = vector.broadcast %cst_11 : f32 to vector<8x1xf32>
    %29 = arith.select %27, %21, %28 : vector<8x1xi1>, vector<8x1xf32>
    %30 = vector.broadcast %29 : vector<8x1xf32> to vector<8x128xf32>
    %31 = arith.mulf %18, %30 : vector<8x128xf32>
    %cst_12 = arith.constant dense<0.000000e+00> : vector<8x32xf32>
    %32 = tpu.matmul %31, %5, %cst_12 {dimension_numbers = #tpu.dot_dimension_numbers<[1], [0], [0], [1], [0, 0, 1, 1], [], []>} : vector<8x128xf32>, vector<128x32xf32>, vector<8x32xf32> -> vector<8x32xf32>
    %c0_13 = arith.constant 0 : index
    %c0_14 = arith.constant 0 : index
    %c0_15 = arith.constant 0 : index
    %33 = vector.load %arg6[%c0_13, %c0_14, %c0_15] : memref<1x8x32xf32, #tpu.memory_space<vmem>>, vector<1x8x32xf32>
    %34 = vector.shape_cast %33 : vector<1x8x32xf32> to vector<8x32xf32>
    %35 = vector.shape_cast %32 : vector<8x32xf32> to vector<1x8x32xf32>
    tpu.vector_store %arg6[%c0_13, %c0_14, %c0_15], %35 {strides = array<i32>} : memref<1x8x32xf32, #tpu.memory_space<vmem>>, vector<1x8x32xf32>,
    %c0_16 = arith.constant 0 : index
    %c0_17 = arith.constant 0 : index
    %c0_18 = arith.constant 0 : index
    %36 = vector.load %arg7[%c0_16, %c0_17, %c0_18] : memref<1x8x128xf32, #tpu.memory_space<vmem>>, vector<1x8x128xf32>
    %37 = vector.shape_cast %36 : vector<1x8x128xf32> to vector<8x128xf32>
    %38 = vector.shape_cast %31 : vector<8x128xf32> to vector<1x8x128xf32>
    tpu.vector_store %arg7[%c0_16, %c0_17, %c0_18], %38 {strides = array<i32>} : memref<1x8x128xf32, #tpu.memory_space<vmem>>, vector<1x8x128xf32>,
    return
  }
  func.func @transform_0(%arg0: i32, %arg1: i32, %arg2: memref<2xi32, #tpu.memory_space<smem>>) -> (i32, i32, i32) {
    %c0_i32 = arith.constant 0 : i32
    %c0_i32_0 = arith.constant 0 : i32
    %c0_i32_1 = arith.constant 0 : i32
    return %arg0, %c0_i32, %c0_i32_0 : i32, i32, i32
  }
  func.func @transform_1(%arg0: i32, %arg1: i32, %arg2: memref<2xi32, #tpu.memory_space<smem>>) -> (i32, i32, i32) {
    %c0_i32 = arith.constant 0 : i32
    %c0_i32_0 = arith.constant 0 : i32
    %c0_i32_1 = arith.constant 0 : i32
    return %arg0, %c0_i32, %c0_i32_0 : i32, i32, i32
  }
  func.func @transform_2(%arg0: i32, %arg1: i32, %arg2: memref<2xi32, #tpu.memory_space<smem>>) -> (i32, i32, i32) {
    %c0_i32 = arith.constant 0 : i32
    %c0_i32_0 = arith.constant 0 : i32
    return %arg0, %arg1, %c0_i32 : i32, i32, i32
  }
  func.func @transform_3(%arg0: i32, %arg1: i32, %arg2: memref<2xi32, #tpu.memory_space<smem>>) -> (i32, i32, i32) {
    %c0_i32 = arith.constant 0 : i32
    %c0_i32_0 = arith.constant 0 : i32
    return %arg0, %arg1, %c0_i32 : i32, i32, i32
  }
  func.func @transform_4(%arg0: i32, %arg1: i32, %arg2: memref<2xi32, #tpu.memory_space<smem>>) -> (i32, i32, i32) {
    %c0_i32 = arith.constant 0 : i32
    %c0_i32_0 = arith.constant 0 : i32
    return %arg0, %arg1, %c0_i32 : i32, i32, i32
  }
}

</mosaic_0001>

<llo_original>
// kernel: tpu_custom_call.1
$region0: #{tpu_custom_call.1}
  #allocation0 [shape = 'u32[]', space=smem, size = 0x4, offset = 0x4, fixed_abs, tag = 'smem constant byte address 0x4 - core index']
  #allocation1 [shape = 'u32[144,128]{1,0:T(1,128)}', space=vmem, size = 0x12000, scoped, tag = 'internal scratch']
  #allocation2 [shape = 's32[1]{0}', space=sflag, size = 0x4, scoped, tag = 'scoped memory for tpu_custom_call.1']
  #allocation3 [shape = 'u8[512]{0}', space=smem, size = 0x200, scoped, tag = 'prefetched SMEM operand 0']
  %s0 = inlined_call_operand.vmem [shape: s32[2], index: 0, kind: input, shape index: {}]
  %s1 = inlined_call_operand.vmem [shape: f32[2,128,32], index: 1, kind: input, shape index: {}]
  %s2 = inlined_call_operand.vmem [shape: f32[2,32,128], index: 2, kind: input, shape index: {}]
  %s3 = inlined_call_operand.vmem [shape: f32[2,8,32], index: 3, kind: input, shape index: {}]
  %s4 = inlined_call_operand.hbm [shape: f32[2,8,32], index: 4, kind: output, shape index: {0}]
  %s5 = inlined_call_operand.hbm [shape: f32[2,8,128], index: 5, kind: output, shape index: {1}]
  %6 = xla_tuple %s4, %s5
  %s7 = sld [smem:[#allocation0]]
  $region53: #{tpu_custom_call.1} parent=0
    _
  %s9 = ssub.s32 1, %s7
  %s10 = scalar_select 0, %s9, %s7
  %s11 = sshll.u32 %s0, 4
  %s12 = int_to_ptr.vmem [resolvable:$true] %s11
  %14 = dma.vmem_to_smem %s12, 16, [#allocation3], [#allocation2]
  %15 = dma.done [#allocation2], 16
  %16 = sfence
  $region1: #{tpu_custom_call.1} parent=0
    #allocation4 [shape = 'u8[8192]{0}', space=vmem, size = 0x2000, scoped, tag = 'output window, operand 0']
    #allocation5 [shape = 's32[2]{0}', space=sflag, size = 0x8, scoped, tag = 'scoped memory for tpu_custom_call.1']
    #allocation6 [shape = 'u8[8192]{0}', space=vmem, size = 0x2000, scoped, tag = 'output window, operand 1']
    #allocation7 [shape = 's32[2]{0}', space=sflag, size = 0x8, scoped, tag = 'scoped memory for tpu_custom_call.1']
    %17 = vsyncpa [#allocation5], 0
    %s18 = scalar_lea.sflag [#allocation5], 1
    %19 = vsyncpa %s18, 0
    %20 = vsyncpa [#allocation7], 0
    %s21 = scalar_lea.sflag [#allocation7], 1
    %22 = vsyncpa %s21, 0
    loop: start=0, step=1, limit=4
    $region2: #{tpu_custom_call.1} parent=1 // loop_pre_header
      _
    $region3: #{tpu_custom_call.1} parent=1 // loop_header
      %s24 = sphi 0, %s28
      %p25 = scmp.ge.s32.totalorder %s24, 4
      %s31 = sphi 0, %s43
      %s32 = sphi 0, %s39
      %s33 = sphi 0, %s31
      %s34 = sphi 0, %s32
      %s35 = sphi 0, %s33
      %s36 = sphi 0, %s34
      %s46 = sphi 0, %s48
      %s49 = sphi 0, %s46
      %s50 = sphi 0, %s49
      %s66 = sphi 0, %s50
      %s72 = sphi 0, %s74
      %s75 = sphi 0, %s72
      %s76 = sphi 0, %s75
      %s92 = sphi 0, %s76
      %s100 = sphi 0, %s102
      %s103 = sphi 0, %s100
      %s104 = sphi 0, %s103
      %s120 = sphi 0, %s104
      %s128 = sphi 0, %s130
      %s131 = sphi 0, %s128
      %s132 = sphi 0, %s131
      %s148 = sphi 0, %s132
      %s156 = sphi 0, %s158
      %s159 = sphi 0, %s156
      %s160 = sphi 0, %s159
      %s176 = sphi 0, %s160
    $region4: #{tpu_custom_call.1} parent=1 // loop_header_branch
      %27 = sbr.rel (%p25) target = $region8
    $region5: #{tpu_custom_call.1} parent=1 // loop_body
      %s29 = ssub.s32 %s24, 1
      %s30 = ssub.s32 %s24, 2
      %s37 = sadd.s32 1, %s32
      %p38 = scmp.ge.s32.totalorder %s37, 1
      %s39 = scalar_select %p38, 0, %s37
      %s40 = sadd.s32 1, %s31
      %s41 = scalar_select %p38, %s40, %s31
      %p42 = scmp.ge.s32.totalorder %s41, 2
      %s43 = scalar_select %p42, 0, %s41
      %s44 = ssub.s32 %s31, %s43
      %p45 = scmp.eq.s32.totalorder %s44, 0
      %s47 = sadd.s32 %s46, 1
      %s48 = scalar_select %p45, %s46, %s47
      %p51 = pneg %p45
      %p52 = scmp.eq.s32.totalorder %s24, 1
      %p53 = por %p51, %p52
      %p54 = scmp.ne.s32.totalorder %s46, %s49
      %p55 = scmp.eq.s32.totalorder %s24, 0
      %p56 = por %p54, %p55
      %p57 = scmp.ne.s32.totalorder %s46, %s49
      %p58 = scmp.eq.s32.totalorder %s29, 1
      %p59 = por %p57, %p58
      %p60 = scmp.ne.s32.totalorder %s49, %s50
      %p61 = scmp.eq.s32.totalorder %s29, 0
      %p62 = por %p60, %p61
      %p63 = scmp.ne.s32.totalorder %s49, %s50
      %p64 = scmp.eq.s32.totalorder %s30, 1
      %p65 = por %p63, %p64
      %p67 = scmp.ne.s32.totalorder %s50, %s66
      %p68 = scmp.eq.s32.totalorder %s30, 0
      %p69 = por %p67, %p68
      %s70 = ssub.s32 %s31, %s43
      %p71 = scmp.eq.s32.totalorder %s70, 0
      %s73 = sadd.s32 %s72, 1
      %s74 = scalar_select %p71, %s72, %s73
      %p77 = pneg %p71
      %p78 = scmp.eq.s32.totalorder %s24, 1
      %p79 = por %p77, %p78
      %p80 = scmp.ne.s32.totalorder %s72, %s75
      %p81 = scmp.eq.s32.totalorder %s24, 0
      %p82 = por %p80, %p81
      %p83 = scmp.ne.s32.totalorder %s72, %s75
      %p84 = scmp.eq.s32.totalorder %s29, 1
      %p85 = por %p83, %p84
      %p86 = scmp.ne.s32.totalorder %s75, %s76
      %p87 = scmp.eq.s32.totalorder %s29, 0
      %p88 = por %p86, %p87
      %p89 = scmp.ne.s32.totalorder %s75, %s76
      %p90 = scmp.eq.s32.totalorder %s30, 1
      %p91 = por %p89, %p90
      %p93 = scmp.ne.s32.totalorder %s76, %s92
      %p94 = scmp.eq.s32.totalorder %s30, 0
      %p95 = por %p93, %p94
      %s96 = ssub.s32 %s31, %s43
      %s97 = ssub.s32 %s32, %s39
      %s98 = sor.u32 %s96, %s97
      %p99 = scmp.eq.s32.totalorder %s98, 0
      %s101 = sadd.s32 %s100, 1
      %s102 = scalar_select %p99, %s100, %s101
      %p105 = pneg %p99
      %p106 = scmp.eq.s32.totalorder %s24, 1
      %p107 = por %p105, %p106
      %p108 = scmp.ne.s32.totalorder %s100, %s103
      %p109 = scmp.eq.s32.totalorder %s24, 0
      %p110 = por %p108, %p109
      %p111 = scmp.ne.s32.totalorder %s100, %s103
      %p112 = scmp.eq.s32.totalorder %s29, 1
      %p113 = por %p111, %p112
      %p114 = scmp.ne.s32.totalorder %s103, %s104
      %p115 = scmp.eq.s32.totalorder %s29, 0
      %p116 = por %p114, %p115
      %p117 = scmp.ne.s32.totalorder %s103, %s104
      %p118 = scmp.eq.s32.totalorder %s30, 1
      %p119 = por %p117, %p118
      %p121 = scmp.ne.s32.totalorder %s104, %s120
      %p122 = scmp.eq.s32.totalorder %s30, 0
      %p123 = por %p121, %p122
      %s124 = ssub.s32 %s31, %s43
      %s125 = ssub.s32 %s32, %s39
      %s126 = sor.u32 %s124, %s125
      %p127 = scmp.eq.s32.totalorder %s126, 0
      %s129 = sadd.s32 %s128, 1
      %s130 = scalar_select %p127, %s128, %s129
      %p133 = pneg %p127
      %p134 = scmp.eq.s32.totalorder %s24, 1
      %p135 = por %p133, %p134
      %p136 = scmp.ne.s32.totalorder %s128, %s131
      %p137 = scmp.eq.s32.totalorder %s24, 0
      %p138 = por %p136, %p137
      %p139 = scmp.ne.s32.totalorder %s128, %s131
      %p140 = scmp.eq.s32.totalorder %s29, 1
      %p141 = por %p139, %p140
      %p142 = scmp.ne.s32.totalorder %s131, %s132
      %p143 = scmp.eq.s32.totalorder %s29, 0
      %p144 = por %p142, %p143
      %p145 = scmp.ne.s32.totalorder %s131, %s132
      %p146 = scmp.eq.s32.totalorder %s30, 1
      %p147 = por %p145, %p146
      %p149 = scmp.ne.s32.totalorder %s132, %s148
      %p150 = scmp.eq.s32.totalorder %s30, 0
      %p151 = por %p149, %p150
      %s152 = ssub.s32 %s31, %s43
      %s153 = ssub.s32 %s32, %s39
      %s154 = sor.u32 %s152, %s153
      %p155 = scmp.eq.s32.totalorder %s154, 0
      %s157 = sadd.s32 %s156, 1
      %s158 = scalar_select %p155, %s156, %s157
      %p161 = pneg %p155
      %p162 = scmp.eq.s32.totalorder %s24, 1
      %p163 = por %p161, %p162
      %p164 = scmp.ne.s32.totalorder %s156, %s159
      %p165 = scmp.eq.s32.totalorder %s24, 0
      %p166 = por %p164, %p165
      %p167 = scmp.ne.s32.totalorder %s156, %s159
      %p168 = scmp.eq.s32.totalorder %s29, 1
      %p169 = por %p167, %p168
      %p170 = scmp.ne.s32.totalorder %s159, %s160
      %p171 = scmp.eq.s32.totalorder %s29, 0
      %p172 = por %p170, %p171
      %p173 = scmp.ne.s32.totalorder %s159, %s160
      %p174 = scmp.eq.s32.totalorder %s30, 1
      %p175 = por %p173, %p174
      %p177 = scmp.ne.s32.totalorder %s160, %s176
      %p178 = scmp.eq.s32.totalorder %s30, 0
      %p179 = por %p177, %p178
      %p180 = scmp.le.s32.totalorder 1, %s24
      %p181 = scmp.lt.s32.totalorder %s24, 3
      %p182 = pnand %p180, %p181
      %p183 = pneg %p182
      // Predicated region
      $region9: #{tpu_custom_call.1} parent=5 // pred_check
        _
      $region10: #{tpu_custom_call.1} parent=5 // pred_check_branch
        %185 = sbr.rel (%p182) target = $region12
      $region11: #{tpu_custom_call.1} parent=5 // pred_region
        %s186 = ssub.s32 %s24, 1
      $region12: #{tpu_custom_call.1} parent=5 // pred_fallthru
        _
      %p187 = scmp.lt.s32.totalorder %s24, 2
      // Predicated region
      $region13: #{tpu_custom_call.1} parent=5 // pred_check
        %p188 = pneg %p187
      $region14: #{tpu_custom_call.1} parent=5 // pred_check_branch
        %190 = sbr.rel (%p188) target = $region16
      $region15: #{tpu_custom_call.1} parent=5 // pred_region
        // Predicated region
        $region17: #{tpu_custom_call.1} parent=15 // pred_check
          %p191 = pneg %p56
        $region18: #{tpu_custom_call.1} parent=15 // pred_check_branch
          %193 = sbr.rel (%p191) target = $region20
        $region19: #{tpu_custom_call.1} parent=15 // pred_region
          %p194 = scmp.lt.s32.totalorder %s31, 1
          %s195 = scalar_select %p194, %s31, 1
          %s196 = smul.addr %s195, 16
          %s197 = smul.addr %s196, 8
          %s198 = scalar_lea.vmem %s1, %s197
        $region20: #{tpu_custom_call.1} parent=15 // pred_fallthru
          _
        // Predicated region
        $region21: #{tpu_custom_call.1} parent=15 // pred_check
          %p199 = pneg %p82
        $region22: #{tpu_custom_call.1} parent=15 // pred_check_branch
          %201 = sbr.rel (%p199) target = $region24
        $region23: #{tpu_custom_call.1} parent=15 // pred_region
          %p202 = scmp.lt.s32.totalorder %s31, 1
          %s203 = scalar_select %p202, %s31, 1
          %s204 = smul.addr %s203, 4
          %s205 = smul.addr %s204, 8
          %s206 = scalar_lea.vmem %s2, %s205
        $region24: #{tpu_custom_call.1} parent=15 // pred_fallthru
          _
        // Predicated region
        $region25: #{tpu_custom_call.1} parent=15 // pred_check
          %p207 = pneg %p110
        $region26: #{tpu_custom_call.1} parent=15 // pred_check_branch
          %209 = sbr.rel (%p207) target = $region28
        $region27: #{tpu_custom_call.1} parent=15 // pred_region
          %p210 = scmp.lt.s32.totalorder %s31, 1
          %s211 = scalar_select %p210, %s31, 1
          %p212 = scmp.lt.s32.totalorder %s32, 0
          %s213 = scalar_select %p212, %s32, 0
          %s214 = sadd.s32 %s213, %s211
          %s215 = smul.addr %s214, 8
          %s216 = scalar_lea.vmem %s3, %s215
        $region28: #{tpu_custom_call.1} parent=15 // pred_fallthru
          _
      $region16: #{tpu_custom_call.1} parent=5 // pred_fallthru
        _
      %p217 = scmp.le.s32.totalorder 1, %s24
      %p218 = scmp.lt.s32.totalorder %s24, 3
      %p219 = pnand %p217, %p218
      %p220 = pneg %p219
      // Predicated region
      $region29: #{tpu_custom_call.1} parent=5 // pred_check
        _
      $region30: #{tpu_custom_call.1} parent=5 // pred_check_branch
        %222 = sbr.rel (%p219) target = $region32
      $region31: #{tpu_custom_call.1} parent=5 // pred_region
        %s223 = ssub.s32 %s24, 1
        %p224 = scmp.lt.s32.totalorder %s33, 1
        %s225 = scalar_select %p224, %s33, 1
        %s226 = smul.addr %s225, 16
        %s227 = smul.addr %s226, 8
        %s228 = scalar_lea.vmem %s1, %s227
        %p229 = pneg %p62
        %p230 = pneg %p59
        %p231 = scmp.lt.s32.totalorder %s33, 1
        %s232 = scalar_select %p231, %s33, 1
        %s233 = smul.addr %s232, 4
        %s234 = smul.addr %s233, 8
        %s235 = scalar_lea.vmem %s2, %s234
        %p236 = pneg %p88
        %p237 = pneg %p85
        %p238 = scmp.lt.s32.totalorder %s33, 1
        %s239 = scalar_select %p238, %s33, 1
        %p240 = scmp.lt.s32.totalorder %s34, 0
        %s241 = scalar_select %p240, %s34, 0
        %s242 = sadd.s32 %s241, %s239
        %s243 = smul.addr %s242, 8
        %s244 = scalar_lea.vmem %s3, %s243
        %p245 = pneg %p116
        %p246 = pneg %p113
        %p247 = pneg %p144
        %p248 = pneg %p141
        %s249 = sand.u32 %s131, 1
        %s250 = scalar_lea.sflag [#allocation5], %s249
        %s251 = sand.u32 %s131, 1
        %s252 = smul.addr %s251, 8
        %s253 = scalar_lea.vmem [#allocation4], %s252
        %p254 = pneg %p172
        %p255 = pneg %p169
        %s256 = sand.u32 %s159, 1
        %s257 = scalar_lea.sflag [#allocation7], %s256
        %s258 = sand.u32 %s159, 1
        %s259 = smul.addr %s258, 8
        %s260 = scalar_lea.vmem [#allocation6], %s259
        %p261 = scmp.lt.s32.totalorder %s33, 1
        %s262 = scalar_select %p261, %s33, 1
        %s263 = smul.addr %s262, 16
        %s264 = smul.addr %s263, 8
        %s265 = scalar_lea.vmem %s1, %s264
        %p266 = scmp.lt.s32.totalorder %s33, 1
        %s267 = scalar_select %p266, %s33, 1
        %s268 = smul.addr %s267, 4
        %s269 = smul.addr %s268, 8
        %s270 = scalar_lea.vmem %s2, %s269
        %p271 = scmp.lt.s32.totalorder %s33, 1
        %s272 = scalar_select %p271, %s33, 1
        %p273 = scmp.lt.s32.totalorder %s34, 0
        %s274 = scalar_select %p273, %s34, 0
        %s275 = sadd.s32 %s274, %s272
        %s276 = smul.addr %s275, 8
        %s277 = scalar_lea.vmem %s3, %s276
        %s278 = sld [smem:[#allocation3 + %s33]]
        %v279 = vld [vmem:[%s277] sm:$0xff]
        %v280 = vld [vmem:[%s265] sm:$0xff]
        %v281 = vld [vmem:[%s265 + $0x8] sm:$0xff]
        %v282 = vld [vmem:[%s265 + $0x10] sm:$0xff]
        %v283 = vld [vmem:[%s265 + $0x18] sm:$0xff]
        %v284 = vld [vmem:[%s265 + $0x20] sm:$0xff]
        %v285 = vld [vmem:[%s265 + $0x28] sm:$0xff]
        %v286 = vld [vmem:[%s265 + $0x30] sm:$0xff]
        %v287 = vld [vmem:[%s265 + $0x38] sm:$0xff]
        %v288 = vld [vmem:[%s265 + $0x40] sm:$0xff]
        %v289 = vld [vmem:[%s265 + $0x48] sm:$0xff]
        %v290 = vld [vmem:[%s265 + $0x50] sm:$0xff]
        %v291 = vld [vmem:[%s265 + $0x58] sm:$0xff]
        %v292 = vld [vmem:[%s265 + $0x60] sm:$0xff]
        %v293 = vld [vmem:[%s265 + $0x68] sm:$0xff]
        %v294 = vld [vmem:[%s265 + $0x70] sm:$0xff]
        %v295 = vld [vmem:[%s265 + $0x78] sm:$0xff]
        %v296 = vld [vmem:[%s270] sm:$0xff]
        %v297 = vld [vmem:[%s270 + $0x8] sm:$0xff]
        %v298 = vld [vmem:[%s270 + $0x10] sm:$0xff]
        %v299 = vld [vmem:[%s270 + $0x18] sm:$0xff]
        %vm300 = vcmask 261120
        %v302 = vsel %vm300, %v279, 0
        %304 = vmatprep.subr.mxu0 0.0
        %305 = vmatpush1.msra.mxu0 %v296
        %306 = vmatprep.subr.mxu0 0.0
        %307 = vmatpush1.msra.mxu0 %v297
        %308 = vmatprep.subr.mxu0 0.0
        %309 = vmatpush1.msra.mxu0 %v298
        %310 = vmatprep.subr.mxu0 0.0
        %311 = vmatpush1.msra.mxu0 %v299
        %312 = vmatprep.subr.mxu0 0.0
        %313 = vmatpush1.msra.mxu0 0.0
        %314 = vmatprep.subr.mxu0 0.0
        %315 = vmatpush1.msra.mxu0 0.0
        %316 = vmatprep.subr.mxu0 0.0
        %317 = vmatpush1.msra.mxu0 0.0
        %318 = vmatprep.subr.mxu0 0.0
        %319 = vmatpush1.msra.mxu0 0.0
        %320 = vmatprep.subr.mxu0 0.0
        %321 = vmatpush1.msra.mxu0 0.0
        %322 = vmatprep.subr.mxu0 0.0
        %323 = vmatpush1.msra.mxu0 0.0
        %324 = vmatprep.subr.mxu0 0.0
        %325 = vmatpush1.msra.mxu0 0.0
        %326 = vmatprep.subr.mxu0 0.0
        %327 = vmatpush1.msra.mxu0 0.0
        %328 = vmatprep.subr.mxu0 0.0
        %329 = vmatpush1.msra.mxu0 0.0
        %330 = vmatprep.subr.mxu0 0.0
        %331 = vmatpush1.msra.mxu0 0.0
        %332 = vmatprep.subr.mxu0 0.0
        %333 = vmatpush1.msra.mxu0 0.0
        %334 = vmatprep.subr.mxu0 0.0
        %335 = vmatpush1.msra.mxu0 0.0
        %336 = vmatprep.subr.mxu0 0.0
        %337 = vmatpush1.msra.mxu0 0.0
        %338 = vmatprep.subr.mxu0 0.0
        %339 = vmatpush1.msra.mxu0 0.0
        %340 = vmatprep.subr.mxu0 0.0
        %341 = vmatpush1.msra.mxu0 0.0
        %342 = vmatprep.subr.mxu0 0.0
        %343 = vmatpush1.msra.mxu0 0.0
        %344 = vmatprep.subr.mxu0 0.0
        %345 = vmatpush1.msra.mxu0 0.0
        %346 = vmatprep.subr.mxu0 0.0
        %347 = vmatpush1.msra.mxu0 0.0
        %348 = vmatprep.subr.mxu0 0.0
        %349 = vmatpush1.msra.mxu0 0.0
        %350 = vmatprep.subr.mxu0 0.0
        %351 = vmatpush1.msra.mxu0 0.0
        %352 = vmatprep.subr.mxu0 0.0
        %353 = vmatpush1.msra.mxu0 0.0
        %354 = vmatprep.subr.mxu0 0.0
        %355 = vmatpush1.msra.mxu0 0.0
        %356 = vmatprep.subr.mxu0 0.0
        %357 = vmatpush1.msra.mxu0 0.0
        %358 = vmatprep.subr.mxu0 0.0
        %359 = vmatpush1.msra.mxu0 0.0
        %360 = vmatprep.subr.mxu0 0.0
        %361 = vmatpush1.msra.mxu0 0.0
        %362 = vmatprep.subr.mxu0 0.0
        %363 = vmatpush1.msra.mxu0 0.0
        %364 = vmatprep.subr.mxu0 0.0
        %365 = vmatpush1.msra.mxu0 0.0
        %366 = vmatprep.subr.mxu0 0.0
        %367 = vmatpush1.msra.mxu0 0.0
        %368 = vmatprep.mubr.f32.mxu0 0.0
        %369 = vmatmul.mubr.f32.gmra.mrb[0].mxu0 %v302
        %v370 = vpop.f32.mrb[0].mxu0
        %v371 = vadd.f32 0.0, %v370
        %v372 = vpop.f32.mrb[0].mxu0
        %373 = vdwg.mxu0
        %v374 = vlaneseq
        %v375 = vand.u32 %v374, 127
        %v376 = vstv %s278
        %vm377 = vcmp.lt.s32.totalorder %v375, %v376
        %v378 = vsel %vm377, %v371, -1e+30
        %379 = vmax.xlane.f32.xlu0 %v378
        %v380 = vpop.xlane.xlu0 %379
        %v381 = vsub.f32 %v378, %v380
        %v382 = vmul.f32 %v381, 1.442695
        %v383 = vpow.pop %v382
        %384 = vadd.xlane.f32.xlu0 %v383
        %v385 = vpop.xlane.xlu0 %384
        %v386 = vrcp.pop %v385
        %v387 = vlaneseq
        %v388 = vshrl.u32 %v387, 7
        %s389 = smul.u32 %s34, 8
        %v390 = vstv %s389
        %v391 = vadd.s32 %v388, %v390
        %vm392 = vcmp.lt.s32.totalorder %v391, %v376
        %v393 = vsel %vm392, %v386, 0.0
        %v394 = vmul.f32 %v383, %v393
        %395 = vmatprep.subr.mxu0 0.0
        %396 = vmatpush1.msra.mxu0 %v280
        %397 = vmatprep.subr.mxu0 0.0
        %398 = vmatpush1.msra.mxu0 %v281
        %399 = vmatprep.subr.mxu0 0.0
        %400 = vmatpush1.msra.mxu0 %v282
        %401 = vmatprep.subr.mxu0 0.0
        %402 = vmatpush1.msra.mxu0 %v283
        %403 = vmatprep.subr.mxu0 0.0
        %404 = vmatpush1.msra.mxu0 %v284
        %405 = vmatprep.subr.mxu0 0.0
        %406 = vmatpush1.msra.mxu0 %v285
        %407 = vmatprep.subr.mxu0 0.0
        %408 = vmatpush1.msra.mxu0 %v286
        %409 = vmatprep.subr.mxu0 0.0
        %410 = vmatpush1.msra.mxu0 %v287
        %411 = vmatprep.subr.mxu0 0.0
        %412 = vmatpush1.msra.mxu0 %v288
        %413 = vmatprep.subr.mxu0 0.0
        %414 = vmatpush1.msra.mxu0 %v289
        %415 = vmatprep.subr.mxu0 0.0
        %416 = vmatpush1.msra.mxu0 %v290
        %417 = vmatprep.subr.mxu0 0.0
        %418 = vmatpush1.msra.mxu0 %v291
        %419 = vmatprep.subr.mxu0 0.0
        %420 = vmatpush1.msra.mxu0 %v292
        %421 = vmatprep.subr.mxu0 0.0
        %422 = vmatpush1.msra.mxu0 %v293
        %423 = vmatprep.subr.mxu0 0.0
        %424 = vmatpush1.msra.mxu0 %v294
        %425 = vmatprep.subr.mxu0 0.0
        %426 = vmatpush1.msra.mxu0 %v295
        %427 = vmatprep.subr.mxu0 0.0
        %428 = vmatpush1.msra.mxu0 0.0
        %429 = vmatprep.subr.mxu0 0.0
        %430 = vmatpush1.msra.mxu0 0.0
        %431 = vmatprep.subr.mxu0 0.0
        %432 = vmatpush1.msra.mxu0 0.0
        %433 = vmatprep.subr.mxu0 0.0
        %434 = vmatpush1.msra.mxu0 0.0
        %435 = vmatprep.subr.mxu0 0.0
        %436 = vmatpush1.msra.mxu0 0.0
        %437 = vmatprep.subr.mxu0 0.0
        %438 = vmatpush1.msra.mxu0 0.0
        %439 = vmatprep.subr.mxu0 0.0
        %440 = vmatpush1.msra.mxu0 0.0
        %441 = vmatprep.subr.mxu0 0.0
        %442 = vmatpush1.msra.mxu0 0.0
        %443 = vmatprep.subr.mxu0 0.0
        %444 = vmatpush1.msra.mxu0 0.0
        %445 = vmatprep.subr.mxu0 0.0
        %446 = vmatpush1.msra.mxu0 0.0
        %447 = vmatprep.subr.mxu0 0.0
        %448 = vmatpush1.msra.mxu0 0.0
        %449 = vmatprep.subr.mxu0 0.0
        %450 = vmatpush1.msra.mxu0 0.0
        %451 = vmatprep.subr.mxu0 0.0
        %452 = vmatpush1.msra.mxu0 0.0
        %453 = vmatprep.subr.mxu0 0.0
        %454 = vmatpush1.msra.mxu0 0.0
        %455 = vmatprep.subr.mxu0 0.0
        %456 = vmatpush1.msra.mxu0 0.0
        %457 = vmatprep.subr.mxu0 0.0
        %458 = vmatpush1.msra.mxu0 0.0
        %459 = vmatprep.mubr.f32.mxu0 0.0
        %460 = vmatmul.mubr.f32.gmra.mrb[0].mxu0 %v394
        %v461 = vpop.f32.mrb[0].mxu0
        %v462 = vadd.f32 0.0, %v461
        %v463 = vpop.f32.mrb[0].mxu0
        %464 = vdwg.mxu0
        %465 = vst.msk [vmem:[%s253] sm:$0xff] %vm300, %v462
        %466 = vst [vmem:[%s260] sm:$0xff] %v394
        %s467 = sand.u32 %s131, 1
        %s468 = scalar_lea.sflag [#allocation5], %s467
        %s469 = sand.u32 %s131, 1
        %s470 = smul.addr %s469, 8
        %s471 = scalar_lea.vmem [#allocation4], %s470
        %s472 = sand.u32 %s159, 1
        %s473 = scalar_lea.sflag [#allocation7], %s472
        %s474 = sand.u32 %s159, 1
        %s475 = smul.addr %s474, 8
        %s476 = scalar_lea.vmem [#allocation6], %s475
        // Predicated region
        $region33: #{tpu_custom_call.1} parent=31 // pred_check
          %p477 = pneg %p141
        $region34: #{tpu_custom_call.1} parent=31 // pred_check_branch
          %479 = sbr.rel (%p477) target = $region36
        $region35: #{tpu_custom_call.1} parent=31 // pred_region
          %s481 = ssub.s32 128, 128
          %482 = vsyncadd %s468, %s481
          %s483 = sadd.s32 %s34, %s33
          %s484 = smul.addr %s483, 128
          %s485 = scalar_lea.hbm %s4, %s484
          %s487 = sshll.u32 %s471, 4
          %s488 = int_to_ptr.vmem [resolvable:$true] %s487
          %490 = dma.vmem_to_hbm [thread:$0]  %s488, 128, %s485, %s468
        $region36: #{tpu_custom_call.1} parent=31 // pred_fallthru
          _
        // Predicated region
        $region37: #{tpu_custom_call.1} parent=31 // pred_check
          %p491 = pneg %p169
        $region38: #{tpu_custom_call.1} parent=31 // pred_check_branch
          %493 = sbr.rel (%p491) target = $region40
        $region39: #{tpu_custom_call.1} parent=31 // pred_region
          %s495 = ssub.s32 128, 128
          %496 = vsyncadd %s473, %s495
          %s497 = sadd.s32 %s34, %s33
          %s498 = smul.addr %s497, 128
          %s499 = scalar_lea.hbm %s5, %s498
          %s501 = sshll.u32 %s476, 4
          %s502 = int_to_ptr.vmem [resolvable:$true] %s501
          %504 = dma.vmem_to_hbm [thread:$0]  %s502, 128, %s499, %s473
        $region40: #{tpu_custom_call.1} parent=31 // pred_fallthru
          _
      $region32: #{tpu_custom_call.1} parent=5 // pred_fallthru
        _
      %p505 = scmp.le.s32.totalorder 2, %s24
      // Predicated region
      $region41: #{tpu_custom_call.1} parent=5 // pred_check
        %p506 = pneg %p505
      $region42: #{tpu_custom_call.1} parent=5 // pred_check_branch
        %508 = sbr.rel (%p506) target = $region44
      $region43: #{tpu_custom_call.1} parent=5 // pred_region
        %s509 = ssub.s32 %s24, 2
        // Predicated region
        $region45: #{tpu_custom_call.1} parent=43 // pred_check
          %p510 = pneg %p147
        $region46: #{tpu_custom_call.1} parent=43 // pred_check_branch
          %512 = sbr.rel (%p510) target = $region48
        $region47: #{tpu_custom_call.1} parent=43 // pred_region
          %s513 = sand.u32 %s132, 1
          %s514 = scalar_lea.sflag [#allocation5], %s513
          %s515 = sand.u32 %s132, 1
          %s516 = smul.addr %s515, 8
          %s517 = scalar_lea.vmem [#allocation4], %s516
          %518 = dma.done %s514, 128
        $region48: #{tpu_custom_call.1} parent=43 // pred_fallthru
          _
        // Predicated region
        $region49: #{tpu_custom_call.1} parent=43 // pred_check
          %p519 = pneg %p175
        $region50: #{tpu_custom_call.1} parent=43 // pred_check_branch
          %521 = sbr.rel (%p519) target = $region52
        $region51: #{tpu_custom_call.1} parent=43 // pred_region
          %s522 = sand.u32 %s160, 1
          %s523 = scalar_lea.sflag [#allocation7], %s522
          %s524 = sand.u32 %s160, 1
          %s525 = smul.addr %s524, 8
          %s526 = scalar_lea.vmem [#allocation6], %s525
          %527 = dma.done %s523, 128
        $region52: #{tpu_custom_call.1} parent=43 // pred_fallthru
          _
      $region44: #{tpu_custom_call.1} parent=5 // pred_fallthru
        _
    $region6: #{tpu_custom_call.1} parent=1 // loop_footer
      %s28 = sadd.s32 1, %s24
    $region7: #{tpu_custom_call.1} parent=1 // loop_footer_branch
      %23 = sbr.rel target = $region3
    $region8: #{tpu_custom_call.1} parent=1 // loop_exit
      _
    %528 = vsyncpa [#allocation5], 1
    %s529 = scalar_lea.sflag [#allocation5], 1
    %530 = vsyncpa %s529, 1
    %531 = vsyncpa [#allocation7], 1
    %s532 = scalar_lea.sflag [#allocation7], 1
    %533 = vsyncpa %s532, 1

</llo_original>
